<compile_context>
chip_gen: v5e
topology: v5e:2x2
jax: 0.10.0
libtpu: 0.0.40
codegen_flags: <defaults>
</compile_context>

<pallas_src>
import functools

import jax
import jax.numpy as jnp
from jax.experimental import pallas as pl
from jax.experimental.pallas import tpu as pltpu


def _pick_spatial_tile(S, cap=8192):
    """Largest lane-dense spatial tile: full S if small, else a multiple of 128
    that divides S (falling back to `cap` with a masked tail tile)."""
    if S <= cap:
        return S
    t = (cap // 128) * 128
    while t >= 128:
        if S % t == 0:
            return t
        t -= 128
    return (cap // 128) * 128  # partial last tile handled by Pallas masking


def _sca3d_kernel(gate_ref, wsp_ref, x_ref, o_ref, *, C2):
    """One (batch, spatial-tile) step.

    gate_ref : (1, C2, 1)  precomputed channel gate, 1 + sigmoid(MLP(avgpool(x0)))
    wsp_ref  : (C2, 1)     1x1x1 spatial-SE conv weight (column vector)
    x_ref    : (1, C, TS)  input tile, channels on sublanes, spatial on lanes
    o_ref    : (1, C, TS)  output tile (channel-shuffled order)
    """
    x = x_ref[0]                      # (C, TS)
    x0 = x[:C2, :]                    # first channel half  (channel SE path)
    x1 = x[C2:, :]                    # second channel half (spatial SE path)

    # ---- channel squeeze-excitation (+ residual folded into the gate) -------
    a = x0 * gate_ref[0]              # (C2, TS) = x0 * (1 + g)

    # ---- spatial squeeze-excitation: 1x1x1 conv as VPU mult + sublane reduce -
    smap = jnp.sum(wsp_ref[...] * x1, axis=0, keepdims=True)     # (1, TS)
    b = x1 * (jax.nn.sigmoid(smap) + 1.0)                        # (C2, TS)

    # ---- fused channel_shuffle(groups=2): out[2i] = a[i], out[2i+1] = b[i] ---
    # Static per-row stores into the VMEM output block build the interleaved tile
    # in place; the HBM writeback remains one full (C, TS) block DMA, so the
    # separate wrapper transpose pass is eliminated.
    # TODO(synk): if/when Mosaic reliably lowers the (C2,2,TS)->(C,TS) sublane
    # reshape, replace the unrolled row stores with a single full-tile store.
    for i in range(C2):
        o_ref[0, 2 * i : 2 * i + 1, :] = a[i : i + 1, :]
        o_ref[0, 2 * i + 1 : 2 * i + 2, :] = b[i : i + 1, :]


def sca3d_forward(x, params):
    """x: (B, C, D, H, W) float32 (NCDHW, as in PyTorch)."""
    w1, b1, w2, b2, wsp = params
    B, C = x.shape[0], x.shape[1]
    spatial = x.shape[2:]
    S = 1
    for s in spatial:
        S *= s
    C2 = C // 2

    xr = x.reshape(B, C, S)

    # ---- hoisted channel-excitation gate (tiny; needs full-volume avg pool) --
    mean = jnp.mean(xr[:, :C2, :], axis=-1)                        # (B, C2)
    h = jnp.maximum(mean @ w1.T + b1.reshape(1, -1), 0.0)          # (B, Cr)
    g = jax.nn.sigmoid(h @ w2.T + b2.reshape(1, -1))               # (B, C2)
    gate = (1.0 + g).reshape(B, C2, 1).astype(jnp.float32)         # residual folded in
    wsp_col = wsp.reshape(C2, 1).astype(jnp.float32)

    # ---- spatial tiling --------------------------------------------------------
    TS = _pick_spatial_tile(S)
    n_t = pl.cdiv(S, TS)

    block_bytes = C * TS * 4
    vmem_limit = int(min(max(6 * block_bytes + (1 << 20), 8 << 20), 48 << 20))

    cost = pl.CostEstimate(
        flops=8 * B * C * S,
        transcendentals=B * S,
        bytes_accessed=2 * B * C * S * 4,
    )

    out = pl.pallas_call(
        functools.partial(_sca3d_kernel, C2=C2),
        out_shape=jax.ShapeDtypeStruct((B, C, S), jnp.float32),
        grid_spec=pltpu.PrefetchScalarGridSpec(
            num_scalar_prefetch=0,
            grid=(B, n_t),
            in_specs=[
                pl.BlockSpec((1, C2, 1), lambda b, t: (b, 0, 0)),   # channel gate
                pl.BlockSpec((C2, 1), lambda b, t: (0, 0)),         # spatial-SE weight
                pl.BlockSpec((1, C, TS), lambda b, t: (b, 0, t)),   # x tile
            ],
            out_specs=pl.BlockSpec((1, C, TS), lambda b, t: (b, 0, t)),
        ),
        compiler_params=pltpu.CompilerParams(
            dimension_semantics=("parallel", "parallel"),
            vmem_limit_bytes=vmem_limit,
        ),
        cost_estimate=cost,
    )(gate, wsp_col, xr)

    # channel shuffle already fused into the kernel's store pattern; just unflatten.
    return out.reshape((B, C) + spatial)


def sca3d_reference(x, params):
    """Pure-JAX reference matching the PyTorch forward exactly."""
    w1, b1, w2, b2, wsp = params
    B, C = x.shape[0], x.shape[1]
    C2 = C // 2
    x0, x1 = x[:, :C2], x[:, C2:]
    mean = jnp.mean(x0, axis=(2, 3, 4))                          # (B, C2)
    h = jnp.maximum(mean @ w1.T + b1[:, 0], 0.0)                 # (B, Cr)
    g = jax.nn.sigmoid(h @ w2.T + b2[:, 0])                      # (B, C2)
    chn = x0 * g[:, :, None, None, None]
    smap = jax.nn.sigmoid(jnp.einsum('c,bcdhw->bdhw', wsp[0], x1))
    spa = x1 * smap[:, None]
    out = jnp.concatenate([chn, spa], axis=1) + x
    b, c, d, hh, ww = out.shape
    out = out.reshape(b, 2, c // 2, d, hh, ww)
    out = jnp.transpose(out, (0, 2, 1, 3, 4, 5)).reshape(b, c, d, hh, ww)
    return out


if __name__ == "__main__":
    # Small shapes consistent with the module: channel=8, reduction=2.
    B, C, D, H, W = 2, 8, 8, 8, 8
    reduction = 2
    C2 = C // 2
    Cr = int(C // (2 * reduction))

    key = jax.random.PRNGKey(0)
    kx, k1, k2, k3, k4, k5 = jax.random.split(key, 6)

    x = jax.random.normal(kx, (B, C, D, H, W), dtype=jnp.float32)

    # Deterministic synthetic parameters (PyTorch Linear weight layout: (out, in)).
    w1 = 0.3 * jax.random.normal(k1, (Cr, C2), dtype=jnp.float32)
    b1 = 0.1 * jax.random.normal(k2, (Cr, 1), dtype=jnp.float32)
    w2 = 0.3 * jax.random.normal(k3, (C2, Cr), dtype=jnp.float32)
    b2 = 0.1 * jax.random.normal(k4, (C2, 1), dtype=jnp.float32)
    wsp = 0.3 * jax.random.normal(k5, (1, C2), dtype=jnp.float32)  # Conv3d(C2->1, 1x1x1, no bias)
    params = (w1, b1, w2, b2, wsp)

    fwd = jax.jit(sca3d_forward)
    out = jax.block_until_ready(fwd(x, params))
    ref = jax.block_until_ready(sca3d_reference(x, params))

    assert out.shape == (B, C, D, H, W)
    assert jnp.allclose(out, ref, rtol=1e-4, atol=1e-4), "mismatch vs reference"

    print("KERNEL_OK")
</pallas_src>

<mosaic_0001>
module attributes {stable_mosaic.version = 11 : i64} {
  func.func @_sca3d_kernel(%arg0: i32, %arg1: i32, %arg2: memref<1x4x1xf32, #tpu.memory_space<vmem>>, %arg3: memref<4x1xf32, #tpu.memory_space<vmem>>, %arg4: memref<1x8x512xf32, #tpu.memory_space<vmem>>, %arg5: memref<1x8x512xf32, #tpu.memory_space<vmem>>) attributes {dimension_semantics = [#tpu.dimension_semantics<parallel>, #tpu.dimension_semantics<parallel>], iteration_bounds = array<i64: 2, 1>, scalar_prefetch = 0 : i64, scratch_operands = 0 : i64, tpu.core_type = #tpu.core_type<tc>, window_params = [{transform_indices = @transform_0, window_bounds = array<i64: 1, 4, 1>}, {pipeline_mode = #tpu.pipeline_mode<synchronous>, transform_indices = @transform_1, window_bounds = array<i64: 4, 1>}, {transform_indices = @transform_2, window_bounds = array<i64: 1, 8, 512>}, {transform_indices = @transform_3, window_bounds = array<i64: 1, 8, 512>}]} {
    %c0 = arith.constant 0 : index
    %c0_0 = arith.constant 0 : index
    %c0_1 = arith.constant 0 : index
    %0 = vector.load %arg4[%c0, %c0_0, %c0_1] : memref<1x8x512xf32, #tpu.memory_space<vmem>>, vector<1x8x512xf32>
    %1 = vector.shape_cast %0 : vector<1x8x512xf32> to vector<8x512xf32>
    %2 = vector.extract_strided_slice %1 {offsets = [0, 0], sizes = [4, 512], strides = [1, 1]} : vector<8x512xf32> to vector<4x512xf32>
    %3 = vector.extract_strided_slice %1 {offsets = [4, 0], sizes = [4, 512], strides = [1, 1]} : vector<8x512xf32> to vector<4x512xf32>
    %c0_2 = arith.constant 0 : index
    %c0_3 = arith.constant 0 : index
    %c0_4 = arith.constant 0 : index
    %4 = vector.load %arg2[%c0_2, %c0_3, %c0_4] : memref<1x4x1xf32, #tpu.memory_space<vmem>>, vector<1x4x1xf32>
    %5 = vector.shape_cast %4 : vector<1x4x1xf32> to vector<4x1xf32>
    %6 = vector.broadcast %5 : vector<4x1xf32> to vector<4x512xf32>
    %7 = arith.mulf %2, %6 : vector<4x512xf32>
    %c0_5 = arith.constant 0 : index
    %c0_6 = arith.constant 0 : index
    %8 = vector.load %arg3[%c0_5, %c0_6] : memref<4x1xf32, #tpu.memory_space<vmem>>, vector<4x1xf32>
    %9 = vector.broadcast %8 : vector<4x1xf32> to vector<4x512xf32>
    %10 = arith.mulf %9, %3 : vector<4x512xf32>
    %cst = arith.constant dense<0.000000e+00> : vector<512xf32>
    %11 = vector.multi_reduction <add>, %10, %cst [0] : vector<4x512xf32> to vector<512xf32>
    %12 = vector.shape_cast %11 : vector<512xf32> to vector<1x512xf32>
    %13 = arith.negf %12 : vector<1x512xf32>
    %14 = math.exp %13 : vector<1x512xf32>
    %cst_7 = arith.constant 1.000000e+00 : f32
    %15 = vector.broadcast %cst_7 : f32 to vector<1x512xf32>
    %16 = arith.addf %15, %14 : vector<1x512xf32>
    %17 = arith.divf %15, %16 : vector<1x512xf32>
    %cst_8 = arith.constant 1.000000e+00 : f32
    %18 = vector.broadcast %cst_8 : f32 to vector<1x512xf32>
    %19 = arith.addf %17, %18 : vector<1x512xf32>
    %20 = vector.broadcast %19 : vector<1x512xf32> to vector<4x512xf32>
    %21 = arith.mulf %3, %20 : vector<4x512xf32>
    %22 = vector.extract_strided_slice %7 {offsets = [0, 0], sizes = [1, 512], strides = [1, 1]} : vector<4x512xf32> to vector<1x512xf32>
    %c0_9 = arith.constant 0 : index
    %c0_10 = arith.constant 0 : index
    %c0_11 = arith.constant 0 : index
    %23 = vector.load %arg5[%c0_9, %c0_10, %c0_11] : memref<1x8x512xf32, #tpu.memory_space<vmem>>, vector<1x1x512xf32>
    %24 = vector.shape_cast %23 : vector<1x1x512xf32> to vector<1x512xf32>
    %25 = vector.shape_cast %22 : vector<1x512xf32> to vector<1x1x512xf32>
    tpu.vector_store %arg5[%c0_9, %c0_10, %c0_11], %25 {strides = array<i32>} : memref<1x8x512xf32, #tpu.memory_space<vmem>>, vector<1x1x512xf32>,
    %26 = vector.extract_strided_slice %21 {offsets = [0, 0], sizes = [1, 512], strides = [1, 1]} : vector<4x512xf32> to vector<1x512xf32>
    %c0_12 = arith.constant 0 : index
    %c1 = arith.constant 1 : index
    %c0_13 = arith.constant 0 : index
    %27 = vector.load %arg5[%c0_12, %c1, %c0_13] : memref<1x8x512xf32, #tpu.memory_space<vmem>>, vector<1x1x512xf32>
    %28 = vector.shape_cast %27 : vector<1x1x512xf32> to vector<1x512xf32>
    %29 = vector.shape_cast %26 : vector<1x512xf32> to vector<1x1x512xf32>
    tpu.vector_store %arg5[%c0_12, %c1, %c0_13], %29 {strides = array<i32>} : memref<1x8x512xf32, #tpu.memory_space<vmem>>, vector<1x1x512xf32>,
    %30 = vector.extract_strided_slice %7 {offsets = [1, 0], sizes = [1, 512], strides = [1, 1]} : vector<4x512xf32> to vector<1x512xf32>
    %c0_14 = arith.constant 0 : index
    %c2 = arith.constant 2 : index
    %c0_15 = arith.constant 0 : index
    %31 = vector.load %arg5[%c0_14, %c2, %c0_15] : memref<1x8x512xf32, #tpu.memory_space<vmem>>, vector<1x1x512xf32>
    %32 = vector.shape_cast %31 : vector<1x1x512xf32> to vector<1x512xf32>
    %33 = vector.shape_cast %30 : vector<1x512xf32> to vector<1x1x512xf32>
    tpu.vector_store %arg5[%c0_14, %c2, %c0_15], %33 {strides = array<i32>} : memref<1x8x512xf32, #tpu.memory_space<vmem>>, vector<1x1x512xf32>,
    %34 = vector.extract_strided_slice %21 {offsets = [1, 0], sizes = [1, 512], strides = [1, 1]} : vector<4x512xf32> to vector<1x512xf32>
    %c0_16 = arith.constant 0 : index
    %c3 = arith.constant 3 : index
    %c0_17 = arith.constant 0 : index
    %35 = vector.load %arg5[%c0_16, %c3, %c0_17] : memref<1x8x512xf32, #tpu.memory_space<vmem>>, vector<1x1x512xf32>
    %36 = vector.shape_cast %35 : vector<1x1x512xf32> to vector<1x512xf32>
    %37 = vector.shape_cast %34 : vector<1x512xf32> to vector<1x1x512xf32>
    tpu.vector_store %arg5[%c0_16, %c3, %c0_17], %37 {strides = array<i32>} : memref<1x8x512xf32, #tpu.memory_space<vmem>>, vector<1x1x512xf32>,
    %38 = vector.extract_strided_slice %7 {offsets = [2, 0], sizes = [1, 512], strides = [1, 1]} : vector<4x512xf32> to vector<1x512xf32>
    %c0_18 = arith.constant 0 : index
    %c4 = arith.constant 4 : index
    %c0_19 = arith.constant 0 : index
    %39 = vector.load %arg5[%c0_18, %c4, %c0_19] : memref<1x8x512xf32, #tpu.memory_space<vmem>>, vector<1x1x512xf32>
    %40 = vector.shape_cast %39 : vector<1x1x512xf32> to vector<1x512xf32>
    %41 = vector.shape_cast %38 : vector<1x512xf32> to vector<1x1x512xf32>
    tpu.vector_store %arg5[%c0_18, %c4, %c0_19], %41 {strides = array<i32>} : memref<1x8x512xf32, #tpu.memory_space<vmem>>, vector<1x1x512xf32>,
    %42 = vector.extract_strided_slice %21 {offsets = [2, 0], sizes = [1, 512], strides = [1, 1]} : vector<4x512xf32> to vector<1x512xf32>
    %c0_20 = arith.constant 0 : index
    %c5 = arith.constant 5 : index
    %c0_21 = arith.constant 0 : index
    %43 = vector.load %arg5[%c0_20, %c5, %c0_21] : memref<1x8x512xf32, #tpu.memory_space<vmem>>, vector<1x1x512xf32>
    %44 = vector.shape_cast %43 : vector<1x1x512xf32> to vector<1x512xf32>
    %45 = vector.shape_cast %42 : vector<1x512xf32> to vector<1x1x512xf32>
    tpu.vector_store %arg5[%c0_20, %c5, %c0_21], %45 {strides = array<i32>} : memref<1x8x512xf32, #tpu.memory_space<vmem>>, vector<1x1x512xf32>,
    %46 = vector.extract_strided_slice %7 {offsets = [3, 0], sizes = [1, 512], strides = [1, 1]} : vector<4x512xf32> to vector<1x512xf32>
    %c0_22 = arith.constant 0 : index
    %c6 = arith.constant 6 : index
    %c0_23 = arith.constant 0 : index
    %47 = vector.load %arg5[%c0_22, %c6, %c0_23] : memref<1x8x512xf32, #tpu.memory_space<vmem>>, vector<1x1x512xf32>
    %48 = vector.shape_cast %47 : vector<1x1x512xf32> to vector<1x512xf32>
    %49 = vector.shape_cast %46 : vector<1x512xf32> to vector<1x1x512xf32>
    tpu.vector_store %arg5[%c0_22, %c6, %c0_23], %49 {strides = array<i32>} : memref<1x8x512xf32, #tpu.memory_space<vmem>>, vector<1x1x512xf32>,
    %50 = vector.extract_strided_slice %21 {offsets = [3, 0], sizes = [1, 512], strides = [1, 1]} : vector<4x512xf32> to vector<1x512xf32>
    %c0_24 = arith.constant 0 : index
    %c7 = arith.constant 7 : index
    %c0_25 = arith.constant 0 : index
    %51 = vector.load %arg5[%c0_24, %c7, %c0_25] : memref<1x8x512xf32, #tpu.memory_space<vmem>>, vector<1x1x512xf32>
    %52 = vector.shape_cast %51 : vector<1x1x512xf32> to vector<1x512xf32>
    %53 = vector.shape_cast %50 : vector<1x512xf32> to vector<1x1x512xf32>
    tpu.vector_store %arg5[%c0_24, %c7, %c0_25], %53 {strides = array<i32>} : memref<1x8x512xf32, #tpu.memory_space<vmem>>, vector<1x1x512xf32>,
    return
  }
  func.func @transform_0(%arg0: i32, %arg1: i32) -> (i32, i32, i32) {
    %c0_i32 = arith.constant 0 : i32
    %c0_i32_0 = arith.constant 0 : i32
    %c0_i32_1 = arith.constant 0 : i32
    return %arg0, %c0_i32, %c0_i32_0 : i32, i32, i32
  }
  func.func @transform_1(%arg0: i32, %arg1: i32) -> (i32, i32) {
    %c0_i32 = arith.constant 0 : i32
    %c0_i32_0 = arith.constant 0 : i32
    %c0_i32_1 = arith.constant 0 : i32
    return %c0_i32, %c0_i32_0 : i32, i32
  }
  func.func @transform_2(%arg0: i32, %arg1: i32) -> (i32, i32, i32) {
    %c0_i32 = arith.constant 0 : i32
    %c0_i32_0 = arith.constant 0 : i32
    return %arg0, %c0_i32, %arg1 : i32, i32, i32
  }
  func.func @transform_3(%arg0: i32, %arg1: i32) -> (i32, i32, i32) {
    %c0_i32 = arith.constant 0 : i32
    %c0_i32_0 = arith.constant 0 : i32
    return %arg0, %c0_i32, %arg1 : i32, i32, i32
  }
}

</mosaic_0001>

<llo_original>
// kernel: sca3d_forward.1
$region0: #{sca3d_forward.1}
  #allocation0 [shape = 'u32[]', space=smem, size = 0x4, offset = 0x4, fixed_abs, tag = 'smem constant byte address 0x4 - core index']
  #allocation1 [shape = 'u32[72,128]{1,0:T(1,128)}', space=vmem, size = 0x9000, scoped, tag = 'internal scratch']
  %s0 = inlined_call_operand.vmem [shape: f32[2,4,1], index: 0, kind: input, shape index: {}]
  %s1 = inlined_call_operand.vmem [shape: f32[4,1], index: 1, kind: input, shape index: {}]
  %s2 = inlined_call_operand.vmem [shape: f32[2,8,512], index: 2, kind: input, shape index: {}]
  %s3 = inlined_call_operand.vmem [shape: f32[2,8,512], index: 3, kind: output, shape index: {}]
  %s4 = sld [smem:[#allocation0]]
  $region45: #{sca3d_forward.1} parent=0
    _
  %s6 = ssub.s32 1, %s4
  %s7 = scalar_select 0, %s6, %s4
  loop: start=0, step=1, limit=4
  $region2: #{sca3d_forward.1} parent=0 // loop_pre_header
    _
  $region3: #{sca3d_forward.1} parent=0 // loop_header
    %s9 = sphi 0, %s13
    %p10 = scmp.ge.s32.totalorder %s9, 4
    %s16 = sphi 0, %s28
    %s17 = sphi 0, %s24
    %s18 = sphi 0, %s16
    %s19 = sphi 0, %s17
    %s20 = sphi 0, %s18
    %s21 = sphi 0, %s19
    %s31 = sphi 0, %s33
    %s34 = sphi 0, %s31
    %s35 = sphi 0, %s34
    %s51 = sphi 0, %s35
    %s55 = sphi 0, %s55
    %s57 = sphi 0, %s55
    %s58 = sphi 0, %s57
    %s72 = sphi 0, %s58
    %s80 = sphi 0, %s82
    %s83 = sphi 0, %s80
    %s84 = sphi 0, %s83
    %s100 = sphi 0, %s84
    %s108 = sphi 0, %s110
    %s111 = sphi 0, %s108
    %s112 = sphi 0, %s111
    %s128 = sphi 0, %s112
  $region4: #{sca3d_forward.1} parent=0 // loop_header_branch
    %12 = sbr.rel (%p10) target = $region8
  $region5: #{sca3d_forward.1} parent=0 // loop_body
    %s14 = ssub.s32 %s9, 1
    %s15 = ssub.s32 %s9, 2
    %s22 = sadd.s32 1, %s17
    %p23 = scmp.ge.s32.totalorder %s22, 1
    %s24 = scalar_select %p23, 0, %s22
    %s25 = sadd.s32 1, %s16
    %s26 = scalar_select %p23, %s25, %s16
    %p27 = scmp.ge.s32.totalorder %s26, 2
    %s28 = scalar_select %p27, 0, %s26
    %s29 = ssub.s32 %s16, %s28
    %p30 = scmp.eq.s32.totalorder %s29, 0
    %s32 = sadd.s32 %s31, 1
    %s33 = scalar_select %p30, %s31, %s32
    %p36 = pneg %p30
    %p37 = scmp.eq.s32.totalorder %s9, 1
    %p38 = por %p36, %p37
    %p39 = scmp.ne.s32.totalorder %s31, %s34
    %p40 = scmp.eq.s32.totalorder %s9, 0
    %p41 = por %p39, %p40
    %p42 = scmp.ne.s32.totalorder %s31, %s34
    %p43 = scmp.eq.s32.totalorder %s14, 1
    %p44 = por %p42, %p43
    %p45 = scmp.ne.s32.totalorder %s34, %s35
    %p46 = scmp.eq.s32.totalorder %s14, 0
    %p47 = por %p45, %p46
    %p48 = scmp.ne.s32.totalorder %s34, %s35
    %p49 = scmp.eq.s32.totalorder %s15, 1
    %p50 = por %p48, %p49
    %p52 = scmp.ne.s32.totalorder %s35, %s51
    %p53 = scmp.eq.s32.totalorder %s15, 0
    %p54 = por %p52, %p53
    %s56 = sadd.s32 %s55, 1
    %p59 = scmp.eq.s32.totalorder %s9, 1
    %p60 = scmp.ne.s32.totalorder %s55, %s57
    %p61 = scmp.eq.s32.totalorder %s9, 0
    %p62 = por %p60, %p61
    %p63 = scmp.ne.s32.totalorder %s55, %s57
    %p64 = scmp.eq.s32.totalorder %s14, 1
    %p65 = por %p63, %p64
    %p66 = scmp.ne.s32.totalorder %s57, %s58
    %p67 = scmp.eq.s32.totalorder %s14, 0
    %p68 = por %p66, %p67
    %p69 = scmp.ne.s32.totalorder %s57, %s58
    %p70 = scmp.eq.s32.totalorder %s15, 1
    %p71 = por %p69, %p70
    %p73 = scmp.ne.s32.totalorder %s58, %s72
    %p74 = scmp.eq.s32.totalorder %s15, 0
    %p75 = por %p73, %p74
    %s76 = ssub.s32 %s16, %s28
    %s77 = ssub.s32 %s17, %s24
    %s78 = sor.u32 %s76, %s77
    %p79 = scmp.eq.s32.totalorder %s78, 0
    %s81 = sadd.s32 %s80, 1
    %s82 = scalar_select %p79, %s80, %s81
    %p85 = pneg %p79
    %p86 = scmp.eq.s32.totalorder %s9, 1
    %p87 = por %p85, %p86
    %p88 = scmp.ne.s32.totalorder %s80, %s83
    %p89 = scmp.eq.s32.totalorder %s9, 0
    %p90 = por %p88, %p89
    %p91 = scmp.ne.s32.totalorder %s80, %s83
    %p92 = scmp.eq.s32.totalorder %s14, 1
    %p93 = por %p91, %p92
    %p94 = scmp.ne.s32.totalorder %s83, %s84
    %p95 = scmp.eq.s32.totalorder %s14, 0
    %p96 = por %p94, %p95
    %p97 = scmp.ne.s32.totalorder %s83, %s84
    %p98 = scmp.eq.s32.totalorder %s15, 1
    %p99 = por %p97, %p98
    %p101 = scmp.ne.s32.totalorder %s84, %s100
    %p102 = scmp.eq.s32.totalorder %s15, 0
    %p103 = por %p101, %p102
    %s104 = ssub.s32 %s16, %s28
    %s105 = ssub.s32 %s17, %s24
    %s106 = sor.u32 %s104, %s105
    %p107 = scmp.eq.s32.totalorder %s106, 0
    %s109 = sadd.s32 %s108, 1
    %s110 = scalar_select %p107, %s108, %s109
    %p113 = pneg %p107
    %p114 = scmp.eq.s32.totalorder %s9, 1
    %p115 = por %p113, %p114
    %p116 = scmp.ne.s32.totalorder %s108, %s111
    %p117 = scmp.eq.s32.totalorder %s9, 0
    %p118 = por %p116, %p117
    %p119 = scmp.ne.s32.totalorder %s108, %s111
    %p120 = scmp.eq.s32.totalorder %s14, 1
    %p121 = por %p119, %p120
    %p122 = scmp.ne.s32.totalorder %s111, %s112
    %p123 = scmp.eq.s32.totalorder %s14, 0
    %p124 = por %p122, %p123
    %p125 = scmp.ne.s32.totalorder %s111, %s112
    %p126 = scmp.eq.s32.totalorder %s15, 1
    %p127 = por %p125, %p126
    %p129 = scmp.ne.s32.totalorder %s112, %s128
    %p130 = scmp.eq.s32.totalorder %s15, 0
    %p131 = por %p129, %p130
    %p132 = scmp.le.s32.totalorder 1, %s9
    %p133 = scmp.lt.s32.totalorder %s9, 3
    %p134 = pnand %p132, %p133
    %p135 = pneg %p134
    // Predicated region
    $region9: #{sca3d_forward.1} parent=5 // pred_check
      _
    $region10: #{sca3d_forward.1} parent=5 // pred_check_branch
      %137 = sbr.rel (%p134) target = $region12
    $region11: #{sca3d_forward.1} parent=5 // pred_region
      %s138 = ssub.s32 %s9, 1
      // Predicated region
      $region13: #{sca3d_forward.1} parent=11 // pred_check
        %p139 = pneg %p68
      $region14: #{sca3d_forward.1} parent=11 // pred_check_branch
        %141 = sbr.rel (%p139) target = $region16
      $region15: #{sca3d_forward.1} parent=11 // pred_region
        _
      $region16: #{sca3d_forward.1} parent=11 // pred_fallthru
        _
    $region12: #{sca3d_forward.1} parent=5 // pred_fallthru
      _
    %p142 = scmp.lt.s32.totalorder %s9, 2
    // Predicated region
    $region17: #{sca3d_forward.1} parent=5 // pred_check
      %p143 = pneg %p142
    $region18: #{sca3d_forward.1} parent=5 // pred_check_branch
      %145 = sbr.rel (%p143) target = $region20
    $region19: #{sca3d_forward.1} parent=5 // pred_region
      // Predicated region
      $region21: #{sca3d_forward.1} parent=19 // pred_check
        %p146 = pneg %p41
      $region22: #{sca3d_forward.1} parent=19 // pred_check_branch
        %148 = sbr.rel (%p146) target = $region24
      $region23: #{sca3d_forward.1} parent=19 // pred_region
        %p149 = scmp.lt.s32.totalorder %s16, 1
        %s150 = scalar_select %p149, %s16, 1
        %s151 = smul.addr %s150, 4
        %s152 = scalar_lea.vmem %s0, %s151
      $region24: #{sca3d_forward.1} parent=19 // pred_fallthru
        _
      // Predicated region
      $region25: #{sca3d_forward.1} parent=19 // pred_check
        %p153 = pneg %p90
      $region26: #{sca3d_forward.1} parent=19 // pred_check_branch
        %155 = sbr.rel (%p153) target = $region28
      $region27: #{sca3d_forward.1} parent=19 // pred_region
        %s156 = smul.u32 4, %s17
        %p157 = scmp.lt.s32.totalorder %s16, 1
        %s158 = scalar_select %p157, %s16, 1
        %p159 = scmp.lt.s32.totalorder %s156, 3
        %s160 = scalar_select %p159, %s156, 3
        %s161 = smul.addr %s158, 4
        %s162 = sadd.s32 %s160, %s161
        %s163 = smul.addr %s162, 8
        %s164 = scalar_lea.vmem %s2, %s163
        %s165 = smul.u32 4, %s17
      $region28: #{sca3d_forward.1} parent=19 // pred_fallthru
        _
    $region20: #{sca3d_forward.1} parent=5 // pred_fallthru
      _
    %p166 = scmp.le.s32.totalorder 1, %s9
    %p167 = scmp.lt.s32.totalorder %s9, 3
    %p168 = pnand %p166, %p167
    %p169 = pneg %p168
    // Predicated region
    $region29: #{sca3d_forward.1} parent=5 // pred_check
      _
    $region30: #{sca3d_forward.1} parent=5 // pred_check_branch
      %171 = sbr.rel (%p168) target = $region32
    $region31: #{sca3d_forward.1} parent=5 // pred_region
      %s172 = ssub.s32 %s9, 1
      %p173 = scmp.lt.s32.totalorder %s18, 1
      %s174 = scalar_select %p173, %s18, 1
      %s175 = smul.addr %s174, 4
      %s176 = scalar_lea.vmem %s0, %s175
      %p177 = pneg %p47
      %p178 = pneg %p44
      %p179 = pneg %p68
      %p180 = pneg %p65
      %s181 = smul.u32 4, %s19
      %p182 = scmp.lt.s32.totalorder %s18, 1
      %s183 = scalar_select %p182, %s18, 1
      %p184 = scmp.lt.s32.totalorder %s181, 3
      %s185 = scalar_select %p184, %s181, 3
      %s186 = smul.addr %s183, 4
      %s187 = sadd.s32 %s185, %s186
      %s188 = smul.addr %s187, 8
      %s189 = scalar_lea.vmem %s2, %s188
      %p190 = pneg %p96
      %p191 = pneg %p93
      %p192 = pneg %p124
      %p193 = pneg %p121
      %s194 = smul.u32 4, %s19
      %p195 = scmp.lt.s32.totalorder %s18, 1
      %s196 = scalar_select %p195, %s18, 1
      %p197 = scmp.lt.s32.totalorder %s194, 3
      %s198 = scalar_select %p197, %s194, 3
      %s199 = smul.addr %s196, 4
      %s200 = sadd.s32 %s198, %s199
      %s201 = smul.addr %s200, 8
      %s202 = scalar_lea.vmem %s3, %s201
      %p203 = scmp.lt.s32.totalorder %s18, 1
      %s204 = scalar_select %p203, %s18, 1
      %s205 = smul.addr %s204, 4
      %s206 = scalar_lea.vmem %s0, %s205
      %s207 = smul.u32 4, %s19
      %p208 = scmp.lt.s32.totalorder %s18, 1
      %s209 = scalar_select %p208, %s18, 1
      %p210 = scmp.lt.s32.totalorder %s207, 3
      %s211 = scalar_select %p210, %s207, 3
      %s212 = smul.addr %s209, 4
      %s213 = sadd.s32 %s211, %s212
      %s214 = smul.addr %s213, 8
      %s215 = scalar_lea.vmem %s2, %s214
      %s216 = smul.u32 4, %s19
      %s217 = smul.u32 4, %s19
      %p218 = scmp.lt.s32.totalorder %s18, 1
      %s219 = scalar_select %p218, %s18, 1
      %p220 = scmp.lt.s32.totalorder %s217, 3
      %s221 = scalar_select %p220, %s217, 3
      %s222 = smul.addr %s219, 4
      %s223 = sadd.s32 %s221, %s222
      %s224 = smul.addr %s223, 8
      %s225 = scalar_lea.vmem %s3, %s224
      %s226 = smul.u32 4, %s19
      %v227 = vld [vmem:[%s215] sm:$0xff]
      %v228 = vld [vmem:[%s215 + $0x8] sm:$0xff]
      %v229 = vld [vmem:[%s215 + $0x10] sm:$0xff]
      %v230 = vld [vmem:[%s215 + $0x18] sm:$0xff]
      %v231 = vld [vmem:[%s206] sm:$0xf]
      %233 = vset.pattern.permute.xlu0 0
      %234 = vperm.xlu0 %233, %v231
      %v235 = vpop.permute.xlu0 %234
      %v237 = vmul.f32 %v227, %v235
      %v238 = vmul.f32 %v228, %v235
      %v239 = vmul.f32 %v229, %v235
      %v240 = vmul.f32 %v230, %v235
      %v241 = vld [vmem:[%s1] sm:$0xf]
      %243 = vset.pattern.permute.xlu0 0
      %244 = vperm.xlu0 %243, %v241
      %v245 = vpop.permute.xlu0 %244
      %v251 = vrot.slane %v227, 4
      %v252 = vrot.slane %v228, 4
      %v253 = vrot.slane %v229, 4
      %v254 = vrot.slane %v230, 4
      %v259 = vmul.f32 %v245, %v251
      %v260 = vmul.f32 %v245, %v252
      %v261 = vmul.f32 %v245, %v253
      %v262 = vmul.f32 %v245, %v254
      %vm263 = vcmask 1043456
      %v264 = vsel %vm263, %v259, 0.0
      %v265 = vrot.slane %v264, 4
      %v266 = vadd.f32 %v264, %v265
      %v267 = vrot.slane %v266, 2
      %v268 = vadd.f32 %v266, %v267
      %v269 = vrot.slane %v268, 1
      %v270 = vadd.f32 %v268, %v269
      %v271 = vsel %vm263, %v260, 0.0
      %v272 = vrot.slane %v271, 4
      %v273 = vadd.f32 %v271, %v272
      %v274 = vrot.slane %v273, 2
      %v275 = vadd.f32 %v273, %v274
      %v276 = vrot.slane %v275, 1
      %v277 = vadd.f32 %v275, %v276
      %v278 = vsel %vm263, %v261, 0.0
      %v279 = vrot.slane %v278, 4
      %v280 = vadd.f32 %v278, %v279
      %v281 = vrot.slane %v280, 2
      %v282 = vadd.f32 %v280, %v281
      %v283 = vrot.slane %v282, 1
      %v284 = vadd.f32 %v282, %v283
      %v285 = vsel %vm263, %v262, 0.0
      %v286 = vrot.slane %v285, 4
      %v287 = vadd.f32 %v285, %v286
      %v288 = vrot.slane %v287, 2
      %v289 = vadd.f32 %v287, %v288
      %v290 = vrot.slane %v289, 1
      %v291 = vadd.f32 %v289, %v290
      %v292 = vxor.u32 %v270, 2147483648
      %v293 = vxor.u32 %v277, 2147483648
      %v294 = vxor.u32 %v284, 2147483648
      %v295 = vxor.u32 %v291, 2147483648
      %v296 = vmul.f32 %v292, 1.442695
      %v297 = vpow.pop %v296
      %v298 = vmul.f32 %v293, 1.442695
      %v299 = vpow.pop %v298
      %v300 = vmul.f32 %v294, 1.442695
      %v301 = vpow.pop %v300
      %v302 = vmul.f32 %v295, 1.442695
      %v303 = vpow.pop %v302
      %v304 = vadd.f32 %v297, 1.0
      %v305 = vadd.f32 %v299, 1.0
      %v306 = vadd.f32 %v301, 1.0
      %v307 = vadd.f32 %v303, 1.0
      %v308 = vrcp.pop %v304
      %v309 = vmul.f32 %v304, %v308
      %v310 = vsub.f32 1.0, %v309
      %v311 = vmul.f32 %v308, %v310
      %v312 = vadd.f32 %v308, %v311
      %vm313 = vweird.f32 %v304
      %vm314 = vweird.f32 %v308
      %vm315 = vmor %vm313, %vm314
      %v316 = vsel %vm315, %v308, %v312
      %v317 = vand.u32 2147483647, %v304
      %vm318 = vcmp.eq.f32.partialorder %v317, 8.507059e+37
      %v319 = vand.u32 %v304, 2147483648
      %v320 = vor.u32 1.1754944e-38, %v319
      %v321 = vsel %vm318, %v320, %v316
      %v322 = vmul.f32 1.0, %v321
      %v323 = vrcp.pop %v305
      %v324 = vmul.f32 %v305, %v323
      %v325 = vsub.f32 1.0, %v324
      %v326 = vmul.f32 %v323, %v325
      %v327 = vadd.f32 %v323, %v326
      %vm328 = vweird.f32 %v305
      %vm329 = vweird.f32 %v323
      %vm330 = vmor %vm328, %vm329
      %v331 = vsel %vm330, %v323, %v327
      %v332 = vand.u32 2147483647, %v305
      %vm333 = vcmp.eq.f32.partialorder %v332, 8.507059e+37
      %v334 = vand.u32 %v305, 2147483648
      %v335 = vor.u32 1.1754944e-38, %v334
      %v336 = vsel %vm333, %v335, %v331
      %v337 = vmul.f32 1.0, %v336
      %v338 = vrcp.pop %v306
      %v339 = vmul.f32 %v306, %v338
      %v340 = vsub.f32 1.0, %v339
      %v341 = vmul.f32 %v338, %v340
      %v342 = vadd.f32 %v338, %v341
      %vm343 = vweird.f32 %v306
      %vm344 = vweird.f32 %v338
      %vm345 = vmor %vm343, %vm344
      %v346 = vsel %vm345, %v338, %v342
      %v347 = vand.u32 2147483647, %v306
      %vm348 = vcmp.eq.f32.partialorder %v347, 8.507059e+37
      %v349 = vand.u32 %v306, 2147483648
      %v350 = vor.u32 1.1754944e-38, %v349
      %v351 = vsel %vm348, %v350, %v346
      %v352 = vmul.f32 1.0, %v351
      %v353 = vrcp.pop %v307
      %v354 = vmul.f32 %v307, %v353
      %v355 = vsub.f32 1.0, %v354
      %v356 = vmul.f32 %v353, %v355
      %v357 = vadd.f32 %v353, %v356
      %vm358 = vweird.f32 %v307
      %vm359 = vweird.f32 %v353
      %vm360 = vmor %vm358, %vm359
      %v361 = vsel %vm360, %v353, %v357
      %v362 = vand.u32 2147483647, %v307
      %vm363 = vcmp.eq.f32.partialorder %v362, 8.507059e+37
      %v364 = vand.u32 %v307, 2147483648
      %v365 = vor.u32 1.1754944e-38, %v364
      %v366 = vsel %vm363, %v365, %v361
      %v367 = vmul.f32 1.0, %v366
      %v368 = vadd.f32 %v322, 1.0
      %v369 = vadd.f32 %v337, 1.0
      %v370 = vadd.f32 %v352, 1.0
      %v371 = vadd.f32 %v367, 1.0
      %v372 = vmul.f32 %v227, %v368
      %v373 = vmul.f32 %v228, %v369
      %v374 = vmul.f32 %v229, %v370
      %v375 = vmul.f32 %v230, %v371
      %v380 = vrot.slane %v238, 7
      %v381 = vrot.slane %v239, 6
      %v382 = vrot.slane %v240, 5
      %vm383 = vcmask 1040384
      %v384 = vsel %vm383, %v237, %v380
      %vm385 = vcmask 1042434
      %v386 = vsel %vm385, %v381, %v382
      %vm387 = vcmask 1041408
      %v388 = vsel %vm387, %v384, %v386
      %v390 = vlaneseq
      %vm391 = vcmp.ge.s32.totalorder %v390, 0
      %vm392 = vcmp.lt.s32.totalorder %v390, 512
      %vm393 = vmand %vm391, %vm392
      %394 = vst.msk [vmem:[%s225] ss:$8 sm:$0xf] %vm393, %v388
      %395 = vst.msk [vmem:[%s225] ss:$8 sm:$0x0] %vm393, %v388
      %400 = vst [vmem:[#allocation1] sm:$0xff] %v372
      %401 = vst [vmem:[#allocation1 + $0x9] sm:$0xff] %v373
      %402 = vst [vmem:[#allocation1 + $0x12] sm:$0xff] %v374
      %403 = vst [vmem:[#allocation1 + $0x1b] sm:$0xff] %v375
      %s404 = scalar_lea.vmem [#allocation1], 4
      %v405 = vld [vmem:[%s404] ss:$9 sm:$0xff]
      %s407 = scalar_lea.vmem %s225, 1
      %408 = vst.msk [vmem:[%s407] ss:$8 sm:$0xf] %vm393, %v405
      %409 = vst.msk [vmem:[%s407] ss:$8 sm:$0x0] %vm393, %v405
      %410 = vst [vmem:[#allocation1] sm:$0xff] %v237
      %411 = vst [vmem:[#allocation1 + $0x9] sm:$0xff] %v238
      %412 = vst [vmem:[#allocation1 + $0x12] sm:$0xff] %v239
      %413 = vst [vmem:[#allocation1 + $0x1b] sm:$0xff] %v240
      %s414 = scalar_lea.vmem [#allocation1], 1
      %v415 = vld [vmem:[%s414] ss:$9 sm:$0xff]
      %s417 = scalar_lea.vmem %s225, 2
      %418 = vst.msk [vmem:[%s417] ss:$8 sm:$0xf] %vm393, %v415
      %419 = vst.msk [vmem:[%s417] ss:$8 sm:$0x0] %vm393, %v415
      %420 = vst [vmem:[#allocation1] sm:$0xff] %v372
      %421 = vst [vmem:[#allocation1 + $0x9] sm:$0xff] %v373
      %422 = vst [vmem:[#allocation1 + $0x12] sm:$0xff] %v374
      %423 = vst [vmem:[#allocation1 + $0x1b] sm:$0xff] %v375
      %s424 = scalar_lea.vmem [#allocation1], 5
      %v425 = vld [vmem:[%s424] ss:$9 sm:$0xff]
      %s427 = scalar_lea.vmem %s225, 3
      %428 = vst.msk [vmem:[%s427] ss:$8 sm:$0xf] %vm393, %v425
      %429 = vst.msk [vmem:[%s427] ss:$8 sm:$0x0] %vm393, %v425
      %430 = vst [vmem:[#allocation1] sm:$0xff] %v237
      %431 = vst [vmem:[#allocation1 + $0x9] sm:$0xff] %v238
      %432 = vst [vmem:[#allocation1 + $0x12] sm:$0xff] %v239
      %433 = vst [vmem:[#allocation1 + $0x1b] sm:$0xff] %v240
      %s434 = scalar_lea.vmem [#allocation1], 2
      %v435 = vld [vmem:[%s434] ss:$9 sm:$0xff]
      %s437 = scalar_lea.vmem %s225, 4
      %438 = vst.msk [vmem:[%s437] ss:$8 sm:$0xf] %vm393, %v435
      %439 = vst.msk [vmem:[%s437] ss:$8 sm:$0x0] %vm393, %v435
      %440 = vst [vmem:[#allocation1] sm:$0xff] %v372
      %441 = vst [vmem:[#allocation1 + $0x9] sm:$0xff] %v373
      %442 = vst [vmem:[#allocation1 + $0x12] sm:$0xff] %v374
      %443 = vst [vmem:[#allocation1 + $0x1b] sm:$0xff] %v375
      %s444 = scalar_lea.vmem [#allocation1], 6
      %v445 = vld [vmem:[%s444] ss:$9 sm:$0xff]
      %s447 = scalar_lea.vmem %s225, 5
      %448 = vst.msk [vmem:[%s447] ss:$8 sm:$0xf] %vm393, %v445
      %449 = vst.msk [vmem:[%s447] ss:$8 sm:$0x0] %vm393, %v445
      %450 = vst [vmem:[#allocation1] sm:$0xff] %v237
      %451 = vst [vmem:[#allocation1 + $0x9] sm:$0xff] %v238
      %452 = vst [vmem:[#allocation1 + $0x12] sm:$0xff] %v239
      %453 = vst [vmem:[#allocation1 + $0x1b] sm:$0xff] %v240
      %s454 = scalar_lea.vmem [#allocation1], 3
      %v455 = vld [vmem:[%s454] ss:$9 sm:$0xff]
      %s457 = scalar_lea.vmem %s225, 6
      %458 = vst.msk [vmem:[%s457] ss:$8 sm:$0xf] %vm393, %v455
      %459 = vst.msk [vmem:[%s457] ss:$8 sm:$0x0] %vm393, %v455
      %460 = vst [vmem:[#allocation1] sm:$0xff] %v372
      %461 = vst [vmem:[#allocation1 + $0x9] sm:$0xff] %v373
      %462 = vst [vmem:[#allocation1 + $0x12] sm:$0xff] %v374
      %463 = vst [vmem:[#allocation1 + $0x1b] sm:$0xff] %v375
      %s464 = scalar_lea.vmem [#allocation1], 7
      %v465 = vld [vmem:[%s464] ss:$9 sm:$0xff]
      %s467 = scalar_lea.vmem %s225, 7
      %468 = vst.msk [vmem:[%s467] ss:$8 sm:$0xf] %vm393, %v465
      %469 = vst.msk [vmem:[%s467] ss:$8 sm:$0x0] %vm393, %v465
      %s470 = smul.u32 4, %s19
      %p471 = scmp.lt.s32.totalorder %s18, 1
      %s472 = scalar_select %p471, %s18, 1
      %p473 = scmp.lt.s32.totalorder %s470, 3
      %s474 = scalar_select %p473, %s470, 3
      %s475 = smul.addr %s472, 4
      %s476 = sadd.s32 %s474, %s475
      %s477 = smul.addr %s476, 8
      %s478 = scalar_lea.vmem %s3, %s477
      // Predicated region
      $region33: #{sca3d_forward.1} parent=31 // pred_check
        %p479 = pneg %p121
      $region34: #{sca3d_forward.1} parent=31 // pred_check_branch
        %481 = sbr.rel (%p479) target = $region36
      $region35: #{sca3d_forward.1} parent=31 // pred_region
        %s482 = smul.u32 4, %s19
      $region36: #{sca3d_forward.1} parent=31 // pred_fallthru
        _
    $region32: #{sca3d_forward.1} parent=5 // pred_fallthru
      _
    %p483 = scmp.le.s32.totalorder 2, %s9
    // Predicated region
    $region37: #{sca3d_forward.1} parent=5 // pred_check
      %p484 = pneg %p483
    $region38: #{sca3d_forward.1} parent=5 // pred_check_branch
      %486 = sbr.rel (%p484) target = $region40
    $region39: #{sca3d_forward.1} parent=5 // pred_region
      %s487 = ssub.s32 %s9, 2
      // Predicated region
      $region41: #{sca3d_forward.1} parent=39 // pred_check
        %p488 = pneg %p127
      $region42: #{sca3d_forward.1} parent=39 // pred_check_branch
        %490 = sbr.rel (%p488) target = $region44
      $region43: #{sca3d_forward.1} parent=39 // pred_region
        %s491 = smul.u32 4, %s21
        %p492 = scmp.lt.s32.totalorder %s20, 1
        %s493 = scalar_select %p492, %s20, 1
        %p494 = scmp.lt.s32.totalorder %s491, 3
        %s495 = scalar_select %p494, %s491, 3
        %s496 = smul.addr %s493, 4
        %s497 = sadd.s32 %s495, %s496
        %s498 = smul.addr %s497, 8
        %s499 = scalar_lea.vmem %s3, %s498
      $region44: #{sca3d_forward.1} parent=39 // pred_fallthru
        _
    $region40: #{sca3d_forward.1} parent=5 // pred_fallthru
      _
  $region6: #{sca3d_forward.1} parent=0 // loop_footer
    %s13 = sadd.s32 1, %s9
  $region7: #{sca3d_forward.1} parent=0 // loop_footer_branch
    %8 = sbr.rel target = $region3
  $region8: #{sca3d_forward.1} parent=0 // loop_exit
    _

</llo_original>
